<compile_context>
chip_gen: v7x
topology: tpu7x:2x2x1
jax: 0.10.0
libtpu: 0.0.40
codegen_flags: <defaults>
</compile_context>

<pallas_src>
import inspect

import jax
import jax.numpy as jnp
from jax.experimental import pallas as pl
from jax.experimental.pallas import tpu as pltpu


_HAS_PIPELINE_MODE = (
    hasattr(pl, "Buffered")
    and "pipeline_mode" in inspect.signature(pl.BlockSpec).parameters
)


def _round_up(x: int, m: int) -> int:
    return (x + m - 1) // m * m


def _vmem_budget_bytes() -> int:
    """Explicit VMEM budget: 75% of physical capacity (v5e/v6e 128 MiB,
    v7x 64 MiB), conservative fallback if the query is unavailable."""
    try:
        cap = int(pltpu.get_tpu_info().vmem_capacity_bytes)
    except Exception:
        cap = 64 * 1024 * 1024
    return max(int(cap * 0.75), 16 * 1024 * 1024)


def _pick_row_tile(batch: int, seq_len: int, max_rows: int) -> int:
    """Largest row tile TM = g*T with g | batch (so every tile starts on a
    sequence boundary -> the pre-replicated positional slab lines up), that is
    sublane-aligned when possible and fits the VMEM-derived row budget."""
    for g in range(batch, 0, -1):
        if batch % g:
            continue
        tm = g * seq_len
        if tm <= max_rows and (tm % 8 == 0 or tm == batch * seq_len):
            return tm
    return seq_len  # minimum sequence-aligned tile


def _bigram_kernel(idx_ref, tgt_ref, tok_ref, pos_ref, w_ref, b_ref,
                   logits_ref, loss_rows_ref):
    tm = idx_ref.shape[0]
    v_pad = w_ref.shape[1]

    # ---- token embedding: one-hot(idx) @ tok_table (bf16 operands, f32 acc).
    # TODO(synk): above a ~512-1K vocab, replace the one-hot matmul with a
    # scalar-prefetched DMA row gather (PrefetchScalarGridSpec) and add a
    # V-tiled online-logsumexp path; thresholds arrive ~2x earlier on v7x
    # (64 MiB VMEM).  Not needed at these sizes.
    col = jax.lax.broadcasted_iota(jnp.int32, (tm, v_pad), 1)      # (TM, Vp)
    tok_onehot = (idx_ref[...] == col).astype(jnp.bfloat16)        # exact in bf16
    tok_emb = jnp.dot(tok_onehot, tok_ref[...],
                      preferred_element_type=jnp.float32)          # (TM, Ep) f32

    # ---- position embedding: pos_ref is a pre-replicated (TM, E_pad) resident
    #      slab (tiles start on sequence boundaries) -> plain VPU add.
    x = tok_emb + pos_ref[...]

    # ---- lm_head: bf16 x bf16 -> f32 accumulate, + f32 bias.  Padded vocab
    #      columns of b_ref hold -1e30, so no mask/select is needed below.
    logits = jnp.dot(x.astype(jnp.bfloat16), w_ref[...],
                     preferred_element_type=jnp.float32) + b_ref[...]
    logits_ref[...] = logits.astype(logits_ref.dtype)              # lane-dense (TM, Vp)

    # ---- per-row cross entropy partials.  The mean over B*T happens in the
    #      wrapper, so the row grid axis stays "parallel" (both v7x cores).
    m = jnp.max(logits, axis=-1, keepdims=True)                    # (TM, 1)
    lse = jnp.log(jnp.sum(jnp.exp(logits - m), axis=-1, keepdims=True)) + m
    tgt_logit = jnp.sum(jnp.where(tgt_ref[...] == col, logits, 0.0),
                        axis=-1, keepdims=True)                    # (TM, 1)
    loss_rows_ref[...] = lse - tgt_logit


def bigram_forward(idx, targets, tok_table, pos_table, lm_w, lm_b,
                   *, logits_dtype=jnp.float32):
    """Pallas forward pass: returns (logits (B,T,V), loss scalar f32).

    logits_dtype=jnp.bfloat16 halves the dominant HBM write traffic (most
    valuable on v5e); the default f32 matches the PyTorch reference exactly
    up to bf16-matmul error.
    """
    B, T = idx.shape
    V, E = tok_table.shape
    BT = B * T

    V_pad = _round_up(V, 128)
    E_pad = _round_up(E, 128)

    # --- VMEM budget -> row tile size ---------------------------------------
    vmem_limit = _vmem_budget_bytes()
    logits_b = jnp.dtype(logits_dtype).itemsize
    # Resident parameters (tok table + W^T bf16, bias f32); x2 covers the
    # double-buffered fallback path.
    resident = V_pad * E_pad * 2 + E_pad * V_pad * 2 + V_pad * 4
    # Per-row working set: idx/tgt (x2 buffers), resident pos slab row, logits
    # writeback (x2 buffers), per-row loss, plus in-kernel temporaries
    # (one-hot bf16 + iota i32 + exp temps f32, tok_emb f32 + x bf16).
    per_row = (2 * 4 * 2
               + E_pad * 4
               + V_pad * logits_b * 2
               + 4 * 2
               + V_pad * (2 + 4 + 4)
               + E_pad * (4 + 2))
    max_rows = max(int((vmem_limit - 2 * resident) * 0.7) // per_row, T)
    TM = _pick_row_tile(B, T, max_rows)
    n_tiles = BT // TM

    # --- Parameter layout prep (wrapper-side layout plumbing only) ----------
    tok_p = jnp.zeros((V_pad, E_pad), jnp.bfloat16).at[:V, :E].set(
        tok_table.astype(jnp.bfloat16))
    # Pre-replicated positional slab: TM is a multiple of T, tiles start on
    # sequence boundaries, so positions repeat every T rows.
    pos_p = jnp.zeros((TM, E_pad), jnp.float32).at[:, :E].set(
        jnp.tile(pos_table.astype(jnp.float32), (TM // T, 1)))
    w_p = jnp.zeros((E_pad, V_pad), jnp.bfloat16).at[:E, :V].set(
        lm_w.T.astype(jnp.bfloat16))
    # Padded-vocab mask folded into the bias: padded columns get -1e30 so the
    # kernel needs no compare/select; exp(-1e30 - m) underflows to 0 exactly.
    b_p = jnp.full((1, V_pad), -1e30, jnp.float32).at[0, :V].set(
        lm_b.astype(jnp.float32))

    idx2 = idx.reshape(BT, 1).astype(jnp.int32)
    tgt2 = targets.reshape(BT, 1).astype(jnp.int32)

    def _resident_spec(block_shape, single_buffer):
        # Constant index_map (grid-resident) parameter block; single-buffered
        # when supported (default double-buffering wastes VMEM on blocks that
        # never change).
        if single_buffer:
            return pl.BlockSpec(block_shape, lambda i: (0, 0),
                                pipeline_mode=pl.Buffered(1))
        return pl.BlockSpec(block_shape, lambda i: (0, 0))

    def _call(single_buffer):
        out = pl.pallas_call(
            _bigram_kernel,
            grid=(n_tiles,),
            in_specs=[
                pl.BlockSpec((TM, 1), lambda i: (i, 0)),            # idx rows
                pl.BlockSpec((TM, 1), lambda i: (i, 0)),            # target rows
                _resident_spec((V_pad, E_pad), single_buffer),      # token table
                _resident_spec((TM, E_pad), single_buffer),         # pos slab
                _resident_spec((E_pad, V_pad), single_buffer),      # lm_head W^T
                _resident_spec((1, V_pad), single_buffer),          # bias (+mask)
            ],
            out_specs=(
                pl.BlockSpec((TM, V_pad), lambda i: (i, 0)),        # logits
                pl.BlockSpec((TM, 1), lambda i: (i, 0)),            # per-row loss
            ),
            out_shape=(
                jax.ShapeDtypeStruct((BT, V_pad), logits_dtype),
                jax.ShapeDtypeStruct((BT, 1), jnp.float32),
            ),
            compiler_params=pltpu.CompilerParams(
                # Per-tile outputs only -> row axis is safe to shard across
                # TensorCores (2x on v7x, neutral on v5e/v6e).
                dimension_semantics=("parallel",),
                vmem_limit_bytes=vmem_limit,
            ),
        )(idx2, tgt2, tok_p, pos_p, w_p, b_p)
        return jax.block_until_ready(out)

    if _HAS_PIPELINE_MODE:
        try:
            logits_pad, loss_rows = _call(single_buffer=True)
        except Exception:
            # Older Pallas / unsupported single-buffering: fall back to the
            # default double-buffered resident blocks.
            logits_pad, loss_rows = _call(single_buffer=False)
    else:
        logits_pad, loss_rows = _call(single_buffer=False)

    logits = logits_pad[:, :V].reshape(B, T, V)
    loss = jnp.sum(loss_rows) / BT
    return logits, loss


def _reference_forward(idx, targets, tok_table, pos_table, lm_w, lm_b):
    B, T = idx.shape
    tok_emb = tok_table[idx]                                # (B, T, E)
    pos_emb = pos_table[jnp.arange(T)]                      # (T, E)
    x = tok_emb + pos_emb[None]
    logits = x @ lm_w.T + lm_b                              # (B, T, V)
    V = logits.shape[-1]
    lf = logits.reshape(B * T, V)
    tf = targets.reshape(B * T)
    lse = jax.scipy.special.logsumexp(lf, axis=-1)
    loss = jnp.mean(lse - lf[jnp.arange(B * T), tf])
    return logits, loss


if __name__ == "__main__":
    # Small, deterministic config.
    vocab_size = 32
    n_embd = 32
    context_size = 8
    B, T = 2, context_size

    key = jax.random.PRNGKey(0)
    k_tok, k_pos, k_w, k_idx, k_tgt = jax.random.split(key, 5)

    # Deterministic init mirroring the PyTorch module (_init_weights):
    #   embeddings ~ N(0, 0.02), linear weight ~ N(0, 0.02), bias = 0.
    tok_table = 0.02 * jax.random.normal(k_tok, (vocab_size, n_embd), jnp.float32)
    pos_table = 0.02 * jax.random.normal(k_pos, (context_size, n_embd), jnp.float32)
    lm_w = 0.02 * jax.random.normal(k_w, (vocab_size, n_embd), jnp.float32)
    lm_b = jnp.zeros((vocab_size,), jnp.float32)

    idx = jax.random.randint(k_idx, (B, T), 0, vocab_size, jnp.int32)
    targets = jax.random.randint(k_tgt, (B, T), 0, vocab_size, jnp.int32)

    logits, loss = bigram_forward(idx, targets, tok_table, pos_table, lm_w, lm_b)
    jax.block_until_ready((logits, loss))

    ref_logits, ref_loss = _reference_forward(idx, targets, tok_table, pos_table,
                                              lm_w, lm_b)
    assert logits.shape == (B, T, vocab_size)
    # Tolerances account for bf16 matmul inputs (f32 accumulation); values are
    # O(3e-3), observed error is O(5e-5).
    assert jnp.allclose(logits, ref_logits, atol=1e-3, rtol=1e-2), (
        float(jnp.max(jnp.abs(logits - ref_logits))))
    assert jnp.allclose(loss, ref_loss, atol=1e-3, rtol=1e-3), (
        float(loss), float(ref_loss))

    # TODO(synk): `generate()` (autoregressive multinomial sampling loop) is
    # host-side control flow and is intentionally not implemented as a kernel.
    print("KERNEL_OK")
</pallas_src>

<mosaic_0001>
module attributes {stable_mosaic.version = 11 : i64} {
  func.func @_bigram_kernel(%arg0: i32, %arg1: memref<16x1xi32, #tpu.memory_space<vmem>>, %arg2: memref<16x1xi32, #tpu.memory_space<vmem>>, %arg3: memref<128x128xbf16, #tpu.memory_space<vmem>>, %arg4: memref<16x128xf32, #tpu.memory_space<vmem>>, %arg5: memref<128x128xbf16, #tpu.memory_space<vmem>>, %arg6: memref<1x128xf32, #tpu.memory_space<vmem>>, %arg7: memref<16x128xf32, #tpu.memory_space<vmem>>, %arg8: memref<16x1xf32, #tpu.memory_space<vmem>>) attributes {dimension_semantics = [#tpu.dimension_semantics<parallel>], iteration_bounds = array<i64: 1>, scalar_prefetch = 0 : i64, scratch_operands = 0 : i64, tpu.core_type = #tpu.core_type<tc>, window_params = [{transform_indices = @transform_0, window_bounds = array<i64: 16, 1>}, {transform_indices = @transform_1, window_bounds = array<i64: 16, 1>}, {pipeline_mode = #tpu.pipeline_mode<synchronous>, transform_indices = @transform_2, window_bounds = array<i64: 128, 128>}, {pipeline_mode = #tpu.pipeline_mode<synchronous>, transform_indices = @transform_3, window_bounds = array<i64: 16, 128>}, {pipeline_mode = #tpu.pipeline_mode<synchronous>, transform_indices = @transform_4, window_bounds = array<i64: 128, 128>}, {pipeline_mode = #tpu.pipeline_mode<synchronous>, transform_indices = @transform_5, window_bounds = array<i64: 1, 128>}, {transform_indices = @transform_6, window_bounds = array<i64: 16, 128>}, {transform_indices = @transform_7, window_bounds = array<i64: 16, 1>}]} {
    %0 = tpu.iota {dimensions = array<i32: 1>} : vector<16x128xi32>
    %c0 = arith.constant 0 : index
    %c0_0 = arith.constant 0 : index
    %1 = vector.load %arg1[%c0, %c0_0] : memref<16x1xi32, #tpu.memory_space<vmem>>, vector<16x1xi32>
    %2 = vector.broadcast %1 : vector<16x1xi32> to vector<16x128xi32>
    %3 = arith.cmpi eq, %2, %0 : vector<16x128xi32>
    %4 = arith.extui %3 : vector<16x128xi1> to vector<16x128xi32>
    %5 = arith.sitofp %4 : vector<16x128xi32> to vector<16x128xf32>
    %6 = arith.truncf %5 : vector<16x128xf32> to vector<16x128xbf16>
    %c0_1 = arith.constant 0 : index
    %c0_2 = arith.constant 0 : index
    %7 = vector.load %arg3[%c0_1, %c0_2] : memref<128x128xbf16, #tpu.memory_space<vmem>>, vector<128x128xbf16>
    %cst = arith.constant dense<0.000000e+00> : vector<16x128xf32>
    %8 = tpu.matmul %6, %7, %cst {dimension_numbers = #tpu.dot_dimension_numbers<[1], [0], [0], [1], [0, 0, 1, 1], [], []>} : vector<16x128xbf16>, vector<128x128xbf16>, vector<16x128xf32> -> vector<16x128xf32>
    %c0_3 = arith.constant 0 : index
    %c0_4 = arith.constant 0 : index
    %9 = vector.load %arg4[%c0_3, %c0_4] : memref<16x128xf32, #tpu.memory_space<vmem>>, vector<16x128xf32>
    %10 = arith.addf %8, %9 : vector<16x128xf32>
    %11 = arith.truncf %10 : vector<16x128xf32> to vector<16x128xbf16>
    %c0_5 = arith.constant 0 : index
    %c0_6 = arith.constant 0 : index
    %12 = vector.load %arg5[%c0_5, %c0_6] : memref<128x128xbf16, #tpu.memory_space<vmem>>, vector<128x128xbf16>
    %cst_7 = arith.constant dense<0.000000e+00> : vector<16x128xf32>
    %13 = tpu.matmul %11, %12, %cst_7 {dimension_numbers = #tpu.dot_dimension_numbers<[1], [0], [0], [1], [0, 0, 1, 1], [], []>} : vector<16x128xbf16>, vector<128x128xbf16>, vector<16x128xf32> -> vector<16x128xf32>
    %c0_8 = arith.constant 0 : index
    %c0_9 = arith.constant 0 : index
    %14 = vector.load %arg6[%c0_8, %c0_9] : memref<1x128xf32, #tpu.memory_space<vmem>>, vector<1x128xf32>
    %15 = vector.broadcast %14 : vector<1x128xf32> to vector<16x128xf32>
    %16 = arith.addf %13, %15 : vector<16x128xf32>
    %c0_10 = arith.constant 0 : index
    %c0_11 = arith.constant 0 : index
    %17 = vector.load %arg7[%c0_10, %c0_11] : memref<16x128xf32, #tpu.memory_space<vmem>>, vector<16x128xf32>
    tpu.vector_store %arg7[%c0_10, %c0_11], %16 {strides = array<i32>} : memref<16x128xf32, #tpu.memory_space<vmem>>, vector<16x128xf32>,
    %cst_12 = arith.constant dense<0xFF800000> : vector<16xf32>
    %18 = vector.multi_reduction <maximumf>, %16, %cst_12 [1] : vector<16x128xf32> to vector<16xf32>
    %19 = vector.shape_cast %18 : vector<16xf32> to vector<16x1xf32>
    %20 = vector.broadcast %19 : vector<16x1xf32> to vector<16x128xf32>
    %21 = arith.subf %16, %20 : vector<16x128xf32>
    %22 = math.exp %21 : vector<16x128xf32>
    %cst_13 = arith.constant dense<0.000000e+00> : vector<16xf32>
    %23 = vector.multi_reduction <add>, %22, %cst_13 [1] : vector<16x128xf32> to vector<16xf32>
    %24 = vector.shape_cast %23 : vector<16xf32> to vector<16x1xf32>
    %25 = math.log %24 : vector<16x1xf32>
    %26 = arith.addf %25, %19 : vector<16x1xf32>
    %c0_14 = arith.constant 0 : index
    %c0_15 = arith.constant 0 : index
    %27 = vector.load %arg2[%c0_14, %c0_15] : memref<16x1xi32, #tpu.memory_space<vmem>>, vector<16x1xi32>
    %28 = vector.broadcast %27 : vector<16x1xi32> to vector<16x128xi32>
    %29 = arith.cmpi eq, %28, %0 : vector<16x128xi32>
    %cst_16 = arith.constant 0.000000e+00 : f32
    %30 = vector.broadcast %cst_16 : f32 to vector<16x128xf32>
    %31 = arith.select %29, %16, %30 : vector<16x128xi1>, vector<16x128xf32>
    %cst_17 = arith.constant dense<0.000000e+00> : vector<16xf32>
    %32 = vector.multi_reduction <add>, %31, %cst_17 [1] : vector<16x128xf32> to vector<16xf32>
    %33 = vector.shape_cast %32 : vector<16xf32> to vector<16x1xf32>
    %34 = arith.subf %26, %33 : vector<16x1xf32>
    %c0_18 = arith.constant 0 : index
    %c0_19 = arith.constant 0 : index
    %35 = vector.load %arg8[%c0_18, %c0_19] : memref<16x1xf32, #tpu.memory_space<vmem>>, vector<16x1xf32>
    tpu.vector_store %arg8[%c0_18, %c0_19], %34 {strides = array<i32>} : memref<16x1xf32, #tpu.memory_space<vmem>>, vector<16x1xf32>,
    return
  }
  func.func @transform_0(%arg0: i32) -> (i32, i32) {
    %c0_i32 = arith.constant 0 : i32
    %c0_i32_0 = arith.constant 0 : i32
    return %arg0, %c0_i32 : i32, i32
  }
  func.func @transform_1(%arg0: i32) -> (i32, i32) {
    %c0_i32 = arith.constant 0 : i32
    %c0_i32_0 = arith.constant 0 : i32
    return %arg0, %c0_i32 : i32, i32
  }
  func.func @transform_2(%arg0: i32) -> (i32, i32) {
    %c0_i32 = arith.constant 0 : i32
    %c0_i32_0 = arith.constant 0 : i32
    %c0_i32_1 = arith.constant 0 : i32
    return %c0_i32, %c0_i32_0 : i32, i32
  }
  func.func @transform_3(%arg0: i32) -> (i32, i32) {
    %c0_i32 = arith.constant 0 : i32
    %c0_i32_0 = arith.constant 0 : i32
    %c0_i32_1 = arith.constant 0 : i32
    return %c0_i32, %c0_i32_0 : i32, i32
  }
  func.func @transform_4(%arg0: i32) -> (i32, i32) {
    %c0_i32 = arith.constant 0 : i32
    %c0_i32_0 = arith.constant 0 : i32
    %c0_i32_1 = arith.constant 0 : i32
    return %c0_i32, %c0_i32_0 : i32, i32
  }
  func.func @transform_5(%arg0: i32) -> (i32, i32) {
    %c0_i32 = arith.constant 0 : i32
    %c0_i32_0 = arith.constant 0 : i32
    %c0_i32_1 = arith.constant 0 : i32
    return %c0_i32, %c0_i32_0 : i32, i32
  }
  func.func @transform_6(%arg0: i32) -> (i32, i32) {
    %c0_i32 = arith.constant 0 : i32
    %c0_i32_0 = arith.constant 0 : i32
    return %arg0, %c0_i32 : i32, i32
  }
  func.func @transform_7(%arg0: i32) -> (i32, i32) {
    %c0_i32 = arith.constant 0 : i32
    %c0_i32_0 = arith.constant 0 : i32
    return %arg0, %c0_i32 : i32, i32
  }
}

module attributes {stable_mosaic.version = 11 : i64} {
  func.func @_bigram_kernel(%arg0: i32, %arg1: memref<16x1xi32, #tpu.memory_space<vmem>>, %arg2: memref<16x1xi32, #tpu.memory_space<vmem>>, %arg3: memref<128x128xbf16, #tpu.memory_space<vmem>>, %arg4: memref<16x128xf32, #tpu.memory_space<vmem>>, %arg5: memref<128x128xbf16, #tpu.memory_space<vmem>>, %arg6: memref<1x128xf32, #tpu.memory_space<vmem>>, %arg7: memref<16x128xf32, #tpu.memory_space<vmem>>, %arg8: memref<16x1xf32, #tpu.memory_space<vmem>>) attributes {dimension_semantics = [#tpu.dimension_semantics<parallel>], iteration_bounds = array<i64: 1>, scalar_prefetch = 0 : i64, scratch_operands = 0 : i64, tpu.core_type = #tpu.core_type<tc>, window_params = [{transform_indices = @transform_0, window_bounds = array<i64: 16, 1>}, {transform_indices = @transform_1, window_bounds = array<i64: 16, 1>}, {pipeline_mode = #tpu.pipeline_mode<synchronous>, transform_indices = @transform_2, window_bounds = array<i64: 128, 128>}, {pipeline_mode = #tpu.pipeline_mode<synchronous>, transform_indices = @transform_3, window_bounds = array<i64: 16, 128>}, {pipeline_mode = #tpu.pipeline_mode<synchronous>, transform_indices = @transform_4, window_bounds = array<i64: 128, 128>}, {pipeline_mode = #tpu.pipeline_mode<synchronous>, transform_indices = @transform_5, window_bounds = array<i64: 1, 128>}, {transform_indices = @transform_6, window_bounds = array<i64: 16, 128>}, {transform_indices = @transform_7, window_bounds = array<i64: 16, 1>}]} {
    %0 = tpu.iota {dimensions = array<i32: 1>} : vector<16x128xi32>
    %c0 = arith.constant 0 : index
    %c0_0 = arith.constant 0 : index
    %1 = vector.load %arg1[%c0, %c0_0] : memref<16x1xi32, #tpu.memory_space<vmem>>, vector<16x1xi32>
    %2 = vector.broadcast %1 : vector<16x1xi32> to vector<16x128xi32>
    %3 = arith.cmpi eq, %2, %0 : vector<16x128xi32>
    %4 = arith.extui %3 : vector<16x128xi1> to vector<16x128xi32>
    %5 = arith.sitofp %4 : vector<16x128xi32> to vector<16x128xf32>
    %6 = arith.truncf %5 : vector<16x128xf32> to vector<16x128xbf16>
    %c0_1 = arith.constant 0 : index
    %c0_2 = arith.constant 0 : index
    %7 = vector.load %arg3[%c0_1, %c0_2] : memref<128x128xbf16, #tpu.memory_space<vmem>>, vector<128x128xbf16>
    %cst = arith.constant dense<0.000000e+00> : vector<16x128xf32>
    %8 = tpu.matmul %6, %7, %cst {dimension_numbers = #tpu.dot_dimension_numbers<[1], [0], [0], [1], [0, 0, 1, 1], [], []>} : vector<16x128xbf16>, vector<128x128xbf16>, vector<16x128xf32> -> vector<16x128xf32>
    %c0_3 = arith.constant 0 : index
    %c0_4 = arith.constant 0 : index
    %9 = vector.load %arg4[%c0_3, %c0_4] : memref<16x128xf32, #tpu.memory_space<vmem>>, vector<16x128xf32>
    %10 = arith.addf %8, %9 : vector<16x128xf32>
    %11 = arith.truncf %10 : vector<16x128xf32> to vector<16x128xbf16>
    %c0_5 = arith.constant 0 : index
    %c0_6 = arith.constant 0 : index
    %12 = vector.load %arg5[%c0_5, %c0_6] : memref<128x128xbf16, #tpu.memory_space<vmem>>, vector<128x128xbf16>
    %cst_7 = arith.constant dense<0.000000e+00> : vector<16x128xf32>
    %13 = tpu.matmul %11, %12, %cst_7 {dimension_numbers = #tpu.dot_dimension_numbers<[1], [0], [0], [1], [0, 0, 1, 1], [], []>} : vector<16x128xbf16>, vector<128x128xbf16>, vector<16x128xf32> -> vector<16x128xf32>
    %c0_8 = arith.constant 0 : index
    %c0_9 = arith.constant 0 : index
    %14 = vector.load %arg6[%c0_8, %c0_9] : memref<1x128xf32, #tpu.memory_space<vmem>>, vector<1x128xf32>
    %15 = vector.broadcast %14 : vector<1x128xf32> to vector<16x128xf32>
    %16 = arith.addf %13, %15 : vector<16x128xf32>
    %c0_10 = arith.constant 0 : index
    %c0_11 = arith.constant 0 : index
    %17 = vector.load %arg7[%c0_10, %c0_11] : memref<16x128xf32, #tpu.memory_space<vmem>>, vector<16x128xf32>
    tpu.vector_store %arg7[%c0_10, %c0_11], %16 {strides = array<i32>} : memref<16x128xf32, #tpu.memory_space<vmem>>, vector<16x128xf32>,
    %cst_12 = arith.constant dense<0xFF800000> : vector<16xf32>
    %18 = vector.multi_reduction <maximumf>, %16, %cst_12 [1] : vector<16x128xf32> to vector<16xf32>
    %19 = vector.shape_cast %18 : vector<16xf32> to vector<16x1xf32>
    %20 = vector.broadcast %19 : vector<16x1xf32> to vector<16x128xf32>
    %21 = arith.subf %16, %20 : vector<16x128xf32>
    %22 = math.exp %21 : vector<16x128xf32>
    %cst_13 = arith.constant dense<0.000000e+00> : vector<16xf32>
    %23 = vector.multi_reduction <add>, %22, %cst_13 [1] : vector<16x128xf32> to vector<16xf32>
    %24 = vector.shape_cast %23 : vector<16xf32> to vector<16x1xf32>
    %25 = math.log %24 : vector<16x1xf32>
    %26 = arith.addf %25, %19 : vector<16x1xf32>
    %c0_14 = arith.constant 0 : index
    %c0_15 = arith.constant 0 : index
    %27 = vector.load %arg2[%c0_14, %c0_15] : memref<16x1xi32, #tpu.memory_space<vmem>>, vector<16x1xi32>
    %28 = vector.broadcast %27 : vector<16x1xi32> to vector<16x128xi32>
    %29 = arith.cmpi eq, %28, %0 : vector<16x128xi32>
    %cst_16 = arith.constant 0.000000e+00 : f32
    %30 = vector.broadcast %cst_16 : f32 to vector<16x128xf32>
    %31 = arith.select %29, %16, %30 : vector<16x128xi1>, vector<16x128xf32>
    %cst_17 = arith.constant dense<0.000000e+00> : vector<16xf32>
    %32 = vector.multi_reduction <add>, %31, %cst_17 [1] : vector<16x128xf32> to vector<16xf32>
    %33 = vector.shape_cast %32 : vector<16xf32> to vector<16x1xf32>
    %34 = arith.subf %26, %33 : vector<16x1xf32>
    %c0_18 = arith.constant 0 : index
    %c0_19 = arith.constant 0 : index
    %35 = vector.load %arg8[%c0_18, %c0_19] : memref<16x1xf32, #tpu.memory_space<vmem>>, vector<16x1xf32>
    tpu.vector_store %arg8[%c0_18, %c0_19], %34 {strides = array<i32>} : memref<16x1xf32, #tpu.memory_space<vmem>>, vector<16x1xf32>,
    return
  }
  func.func @transform_0(%arg0: i32) -> (i32, i32) {
    %c0_i32 = arith.constant 0 : i32
    %c0_i32_0 = arith.constant 0 : i32
    return %arg0, %c0_i32 : i32, i32
  }
  func.func @transform_1(%arg0: i32) -> (i32, i32) {
    %c0_i32 = arith.constant 0 : i32
    %c0_i32_0 = arith.constant 0 : i32
    return %arg0, %c0_i32 : i32, i32
  }
  func.func @transform_2(%arg0: i32) -> (i32, i32) {
    %c0_i32 = arith.constant 0 : i32
    %c0_i32_0 = arith.constant 0 : i32
    %c0_i32_1 = arith.constant 0 : i32
    return %c0_i32, %c0_i32_0 : i32, i32
  }
  func.func @transform_3(%arg0: i32) -> (i32, i32) {
    %c0_i32 = arith.constant 0 : i32
    %c0_i32_0 = arith.constant 0 : i32
    %c0_i32_1 = arith.constant 0 : i32
    return %c0_i32, %c0_i32_0 : i32, i32
  }
  func.func @transform_4(%arg0: i32) -> (i32, i32) {
    %c0_i32 = arith.constant 0 : i32
    %c0_i32_0 = arith.constant 0 : i32
    %c0_i32_1 = arith.constant 0 : i32
    return %c0_i32, %c0_i32_0 : i32, i32
  }
  func.func @transform_5(%arg0: i32) -> (i32, i32) {
    %c0_i32 = arith.constant 0 : i32
    %c0_i32_0 = arith.constant 0 : i32
    %c0_i32_1 = arith.constant 0 : i32
    return %c0_i32, %c0_i32_0 : i32, i32
  }
  func.func @transform_6(%arg0: i32) -> (i32, i32) {
    %c0_i32 = arith.constant 0 : i32
    %c0_i32_0 = arith.constant 0 : i32
    return %arg0, %c0_i32 : i32, i32
  }
  func.func @transform_7(%arg0: i32) -> (i32, i32) {
    %c0_i32 = arith.constant 0 : i32
    %c0_i32_0 = arith.constant 0 : i32
    return %arg0, %c0_i32 : i32, i32
  }
}

</mosaic_0001>

<llo_original>
// kernel: tpu_custom_call.1
$region0: #{tpu_custom_call.1}
  #allocation0 [shape = 'u32[]', space=smem, size = 0x4, offset = 0x4, fixed_abs, tag = 'smem constant byte address 0x4 - core index']
  #allocation1 [shape = 'u32[144,128]{1,0:T(1,128)}', space=vmem, size = 0x12000, scoped, tag = 'internal scratch']
  %s0 = inlined_call_operand.vmem [shape: s32[16,1], index: 0, kind: input, shape index: {}]
  %s1 = inlined_call_operand.vmem [shape: s32[16,1], index: 1, kind: input, shape index: {}]
  %s2 = inlined_call_operand.hbm [shape: bf16[128,128], index: 2, kind: input, shape index: {}]
  %s3 = inlined_call_operand.vmem [shape: f32[16,128], index: 3, kind: input, shape index: {}]
  %s4 = inlined_call_operand.hbm [shape: bf16[128,128], index: 4, kind: input, shape index: {}]
  %s5 = inlined_call_operand.vmem [shape: f32[1,128], index: 5, kind: input, shape index: {}]
  %s6 = inlined_call_operand.hbm [shape: f32[16,128], index: 6, kind: output, shape index: {0}]
  %s7 = inlined_call_operand.vmem [shape: f32[16,1], index: 7, kind: output, shape index: {1}]
  %8 = xla_tuple %s6, %s7
  %s9 = sld [smem:[#allocation0]]
  $region50: #{tpu_custom_call.1} parent=0
    _
  %s11 = ssub.s32 1, %s9
  %s12 = scalar_select 0, %s11, %s9
  $region1: #{tpu_custom_call.1} parent=0
    #allocation2 [shape = 'u8[32768]{0}', space=vmem, size = 0x8000, scoped, tag = 'input window, operand 2, single buffered']
    #allocation3 [shape = 's32[1]{0}', space=sflag, size = 0x4, scoped, tag = 'scoped memory for tpu_custom_call.1']
    #allocation4 [shape = 's32[1]{0}', space=sflag, size = 0x4, scoped, tag = 'scoped memory for tpu_custom_call.1']
    #allocation5 [shape = 'u8[32768]{0}', space=vmem, size = 0x8000, scoped, tag = 'input window, operand 4, single buffered']
    #allocation6 [shape = 's32[1]{0}', space=sflag, size = 0x4, scoped, tag = 'scoped memory for tpu_custom_call.1']
    #allocation7 [shape = 'u8[8192]{0}', space=vmem, size = 0x2000, scoped, tag = 'output window, operand 0, single buffered']
    %13 = vsyncpa [#allocation3], 0
    %14 = vsyncpa [#allocation6], 0
    %15 = vsyncpa [#allocation4], 0
    // Predicated region
    $region2: #{tpu_custom_call.1} parent=1 // pred_check
      _
    $region3: #{tpu_custom_call.1} parent=1 // pred_check_branch
      %17 = sbr.rel (0) target = $region5
    $region4: #{tpu_custom_call.1} parent=1 // pred_region
      _
    $region5: #{tpu_custom_call.1} parent=1 // pred_fallthru
      _
    // Predicated region
    $region6: #{tpu_custom_call.1} parent=1 // pred_check
      _
    $region7: #{tpu_custom_call.1} parent=1 // pred_check_branch
      %19 = sbr.rel (0) target = $region9
    $region8: #{tpu_custom_call.1} parent=1 // pred_region
      _
    $region9: #{tpu_custom_call.1} parent=1 // pred_fallthru
      _
    // Predicated region
    $region10: #{tpu_custom_call.1} parent=1 // pred_check
      _
    $region11: #{tpu_custom_call.1} parent=1 // pred_check_branch
      %21 = sbr.rel (0) target = $region13
    $region12: #{tpu_custom_call.1} parent=1 // pred_region
      %s23 = ssub.s32 1024, 1024
      %24 = vsyncadd [#allocation3], %s23
      %s25 = sshll.u32 [#allocation2], 4
      %s26 = int_to_ptr.vmem [resolvable:$true] %s25
      %31 = dma.hbm_to_vmem [thread:$0]  %s2, 1024, %s26, [#allocation3], 64, 64, 4
    $region13: #{tpu_custom_call.1} parent=1 // pred_fallthru
      _
    // Predicated region
    $region14: #{tpu_custom_call.1} parent=1 // pred_check
      _
    $region15: #{tpu_custom_call.1} parent=1 // pred_check_branch
      %33 = sbr.rel (0) target = $region17
    $region16: #{tpu_custom_call.1} parent=1 // pred_region
      _
    $region17: #{tpu_custom_call.1} parent=1 // pred_fallthru
      _
    // Predicated region
    $region18: #{tpu_custom_call.1} parent=1 // pred_check
      _
    $region19: #{tpu_custom_call.1} parent=1 // pred_check_branch
      %35 = sbr.rel (0) target = $region21
    $region20: #{tpu_custom_call.1} parent=1 // pred_region
      %s37 = ssub.s32 1024, 1024
      %38 = vsyncadd [#allocation6], %s37
      %s39 = sshll.u32 [#allocation5], 4
      %s40 = int_to_ptr.vmem [resolvable:$true] %s39
      %45 = dma.hbm_to_vmem [thread:$0]  %s4, 1024, %s40, [#allocation6], 64, 64, 4
    $region21: #{tpu_custom_call.1} parent=1 // pred_fallthru
      _
    // Predicated region
    $region22: #{tpu_custom_call.1} parent=1 // pred_check
      _
    $region23: #{tpu_custom_call.1} parent=1 // pred_check_branch
      %47 = sbr.rel (0) target = $region25
    $region24: #{tpu_custom_call.1} parent=1 // pred_region
      _
    $region25: #{tpu_custom_call.1} parent=1 // pred_fallthru
      _
    // Predicated region
    $region26: #{tpu_custom_call.1} parent=1 // pred_check
      _
    $region27: #{tpu_custom_call.1} parent=1 // pred_check_branch
      %49 = sbr.rel (0) target = $region29
    $region28: #{tpu_custom_call.1} parent=1 // pred_region
      %50 = dma.done [#allocation3], 1024
    $region29: #{tpu_custom_call.1} parent=1 // pred_fallthru
      _
    // Predicated region
    $region30: #{tpu_custom_call.1} parent=1 // pred_check
      _
    $region31: #{tpu_custom_call.1} parent=1 // pred_check_branch
      %52 = sbr.rel (0) target = $region33
    $region32: #{tpu_custom_call.1} parent=1 // pred_region
      %53 = dma.done [#allocation6], 1024
    $region33: #{tpu_custom_call.1} parent=1 // pred_fallthru
      _
    %v55 = vlaneseq
    %v56 = vand.u32 %v55, 127
    %v57 = vld [vmem:[%s0] sm:$0xff]
    %v58 = vld [vmem:[%s0 + $0x8] sm:$0xff]
    %59 = vset.pattern.permute.xlu0 0
    %60 = vperm.xlu0 %59, %v57
    %v61 = vpop.permute.xlu0 %60
    %62 = vset.pattern.permute.xlu0 0
    %63 = vperm.xlu0 %62, %v58
    %v64 = vpop.permute.xlu0 %63
    %vm65 = vcmp.eq.s32.totalorder %v61, %v56
    %vm66 = vcmp.eq.s32.totalorder %v64, %v56
    %v67 = vsel %vm65, 1, 0
    %v68 = vsel %vm66, 1, 0
    %v69 = vcvt.s32.f32 %v67
    %v70 = vcvt.s32.f32 %v68
    %v71 = vpack.c.bf16 %v70, %v69
    %v72 = vld [vmem:[#allocation2] sm:$0xf]
    %v73 = vld [vmem:[#allocation2 + $0x4] sm:$0xf]
    %v74 = vld [vmem:[#allocation2 + $0x8] sm:$0xf]
    %v75 = vld [vmem:[#allocation2 + $0xc] sm:$0xf]
    %v76 = vld [vmem:[#allocation2 + $0x10] sm:$0xf]
    %v77 = vld [vmem:[#allocation2 + $0x14] sm:$0xf]
    %v78 = vld [vmem:[#allocation2 + $0x18] sm:$0xf]
    %v79 = vld [vmem:[#allocation2 + $0x1c] sm:$0xf]
    %v80 = vld [vmem:[#allocation2 + $0x20] sm:$0xf]
    %v81 = vld [vmem:[#allocation2 + $0x24] sm:$0xf]
    %v82 = vld [vmem:[#allocation2 + $0x28] sm:$0xf]
    %v83 = vld [vmem:[#allocation2 + $0x2c] sm:$0xf]
    %v84 = vld [vmem:[#allocation2 + $0x30] sm:$0xf]
    %v85 = vld [vmem:[#allocation2 + $0x34] sm:$0xf]
    %v86 = vld [vmem:[#allocation2 + $0x38] sm:$0xf]
    %v87 = vld [vmem:[#allocation2 + $0x3c] sm:$0xf]
    %v88 = vld [vmem:[%s3] sm:$0xff]
    %v89 = vld [vmem:[%s3 + $0x8] sm:$0xff]
    %v106 = vunpack.c.l.b16 %v72
    %v107 = vunpack.c.l.b16 %v73
    %v108 = vunpack.c.l.b16 %v74
    %v109 = vunpack.c.l.b16 %v75
    %v110 = vunpack.c.l.b16 %v76
    %v111 = vunpack.c.l.b16 %v77
    %v112 = vunpack.c.l.b16 %v78
    %v113 = vunpack.c.l.b16 %v79
    %v114 = vunpack.c.l.b16 %v80
    %v115 = vunpack.c.l.b16 %v81
    %v116 = vunpack.c.l.b16 %v82
    %v117 = vunpack.c.l.b16 %v83
    %v118 = vunpack.c.l.b16 %v84
    %v119 = vunpack.c.l.b16 %v85
    %v120 = vunpack.c.l.b16 %v86
    %v121 = vunpack.c.l.b16 %v87
    %v122 = vpack.c.b16 %v107, %v106
    %v123 = vpack.c.b16 %v109, %v108
    %v124 = vpack.c.b16 %v111, %v110
    %v125 = vpack.c.b16 %v113, %v112
    %v126 = vpack.c.b16 %v115, %v114
    %v127 = vpack.c.b16 %v117, %v116
    %v128 = vpack.c.b16 %v119, %v118
    %v129 = vpack.c.b16 %v121, %v120
    %138 = vmatprep.subr.bf16.mxu0 0
    %139 = vmatpush1.bf16.msra.mxu0 %v122
    %140 = vmatprep.subr.bf16.mxu0 0
    %141 = vmatpush1.bf16.msra.mxu0 %v123
    %142 = vmatprep.subr.bf16.mxu0 0
    %143 = vmatpush1.bf16.msra.mxu0 %v124
    %144 = vmatprep.subr.bf16.mxu0 0
    %145 = vmatpush1.bf16.msra.mxu0 %v125
    %146 = vmatprep.subr.bf16.mxu0 0
    %147 = vmatpush1.bf16.msra.mxu0 %v126
    %148 = vmatprep.subr.bf16.mxu0 0
    %149 = vmatpush1.bf16.msra.mxu0 %v127
    %150 = vmatprep.subr.bf16.mxu0 0
    %151 = vmatpush1.bf16.msra.mxu0 %v128
    %152 = vmatprep.subr.bf16.mxu0 0
    %153 = vmatpush1.bf16.msra.mxu0 %v129
    %154 = vmatprep.subr.bf16.mxu0 0
    %155 = vmatpush1.bf16.msra.mxu0 0
    %156 = vmatprep.subr.bf16.mxu0 0
    %157 = vmatpush1.bf16.msra.mxu0 0
    %158 = vmatprep.subr.bf16.mxu0 0
    %159 = vmatpush1.bf16.msra.mxu0 0
    %160 = vmatprep.subr.bf16.mxu0 0
    %161 = vmatpush1.bf16.msra.mxu0 0
    %162 = vmatprep.subr.bf16.mxu0 0
    %163 = vmatpush1.bf16.msra.mxu0 0
    %164 = vmatprep.subr.bf16.mxu0 0
    %165 = vmatpush1.bf16.msra.mxu0 0
    %166 = vmatprep.subr.bf16.mxu0 0
    %167 = vmatpush1.bf16.msra.mxu0 0
    %168 = vmatprep.subr.bf16.mxu0 0
    %169 = vmatpush1.bf16.msra.mxu0 0
    %170 = vmatprep.mubr.bf16.mxu0 0
    %171 = vmatmul.mubr.bf16.gmra.mrb[0].mxu0 %v71
    %v172 = vpop.f32.mrb[0].mxu0
    %v173 = vadd.f32 %v88, %v172
    %v174 = vpop.f32.mrb[0].mxu0
    %v175 = vpop.f32.mrb[0].mxu0
    %v176 = vadd.f32 %v89, %v175
    %v177 = vpop.f32.mrb[0].mxu0
    %178 = vdwg.mxu0
    %v179 = vpack.c.bf16 %v176, %v173
    %v180 = vld [vmem:[#allocation5] sm:$0xf]
    %v181 = vld [vmem:[#allocation5 + $0x4] sm:$0xf]
    %v182 = vld [vmem:[#allocation5 + $0x8] sm:$0xf]
    %v183 = vld [vmem:[#allocation5 + $0xc] sm:$0xf]
    %v184 = vld [vmem:[#allocation5 + $0x10] sm:$0xf]
    %v185 = vld [vmem:[#allocation5 + $0x14] sm:$0xf]
    %v186 = vld [vmem:[#allocation5 + $0x18] sm:$0xf]
    %v187 = vld [vmem:[#allocation5 + $0x1c] sm:$0xf]
    %v188 = vld [vmem:[#allocation5 + $0x20] sm:$0xf]
    %v189 = vld [vmem:[#allocation5 + $0x24] sm:$0xf]
    %v190 = vld [vmem:[#allocation5 + $0x28] sm:$0xf]
    %v191 = vld [vmem:[#allocation5 + $0x2c] sm:$0xf]
    %v192 = vld [vmem:[#allocation5 + $0x30] sm:$0xf]
    %v193 = vld [vmem:[#allocation5 + $0x34] sm:$0xf]
    %v194 = vld [vmem:[#allocation5 + $0x38] sm:$0xf]
    %v195 = vld [vmem:[#allocation5 + $0x3c] sm:$0xf]
    %v196 = vld [vmem:[%s5] sm:$0x1]
    %v198 = vlaneseq
    %v199 = vshrl.u32 %v198, 7
    %v200 = vsub.s32 0, %v199
    %v201 = vrot.slane %v196, %v200
    %v219 = vunpack.c.l.b16 %v180
    %v220 = vunpack.c.l.b16 %v181
    %v221 = vunpack.c.l.b16 %v182
    %v222 = vunpack.c.l.b16 %v183
    %v223 = vunpack.c.l.b16 %v184
    %v224 = vunpack.c.l.b16 %v185
    %v225 = vunpack.c.l.b16 %v186
    %v226 = vunpack.c.l.b16 %v187
    %v227 = vunpack.c.l.b16 %v188
    %v228 = vunpack.c.l.b16 %v189
    %v229 = vunpack.c.l.b16 %v190
    %v230 = vunpack.c.l.b16 %v191
    %v231 = vunpack.c.l.b16 %v192
    %v232 = vunpack.c.l.b16 %v193
    %v233 = vunpack.c.l.b16 %v194
    %v234 = vunpack.c.l.b16 %v195
    %v235 = vpack.c.b16 %v220, %v219
    %v236 = vpack.c.b16 %v222, %v221
    %v237 = vpack.c.b16 %v224, %v223
    %v238 = vpack.c.b16 %v226, %v225
    %v239 = vpack.c.b16 %v228, %v227
    %v240 = vpack.c.b16 %v230, %v229
    %v241 = vpack.c.b16 %v232, %v231
    %v242 = vpack.c.b16 %v234, %v233
    %251 = vmatprep.subr.bf16.mxu0 0
    %252 = vmatpush1.bf16.msra.mxu0 %v235
    %253 = vmatprep.subr.bf16.mxu0 0
    %254 = vmatpush1.bf16.msra.mxu0 %v236
    %255 = vmatprep.subr.bf16.mxu0 0
    %256 = vmatpush1.bf16.msra.mxu0 %v237
    %257 = vmatprep.subr.bf16.mxu0 0
    %258 = vmatpush1.bf16.msra.mxu0 %v238
    %259 = vmatprep.subr.bf16.mxu0 0
    %260 = vmatpush1.bf16.msra.mxu0 %v239
    %261 = vmatprep.subr.bf16.mxu0 0
    %262 = vmatpush1.bf16.msra.mxu0 %v240
    %263 = vmatprep.subr.bf16.mxu0 0
    %264 = vmatpush1.bf16.msra.mxu0 %v241
    %265 = vmatprep.subr.bf16.mxu0 0
    %266 = vmatpush1.bf16.msra.mxu0 %v242
    %267 = vmatprep.subr.bf16.mxu0 0
    %268 = vmatpush1.bf16.msra.mxu0 0
    %269 = vmatprep.subr.bf16.mxu0 0
    %270 = vmatpush1.bf16.msra.mxu0 0
    %271 = vmatprep.subr.bf16.mxu0 0
    %272 = vmatpush1.bf16.msra.mxu0 0
    %273 = vmatprep.subr.bf16.mxu0 0
    %274 = vmatpush1.bf16.msra.mxu0 0
    %275 = vmatprep.subr.bf16.mxu0 0
    %276 = vmatpush1.bf16.msra.mxu0 0
    %277 = vmatprep.subr.bf16.mxu0 0
    %278 = vmatpush1.bf16.msra.mxu0 0
    %279 = vmatprep.subr.bf16.mxu0 0
    %280 = vmatpush1.bf16.msra.mxu0 0
    %281 = vmatprep.subr.bf16.mxu0 0
    %282 = vmatpush1.bf16.msra.mxu0 0
    %283 = vmatprep.mubr.bf16.mxu0 0
    %284 = vmatmul.mubr.bf16.gmra.mrb[0].mxu0 %v179
    %v285 = vpop.f32.mrb[0].mxu0
    %v286 = vadd.f32 %v201, %v285
    %v287 = vpop.f32.mrb[0].mxu0
    %v288 = vpop.f32.mrb[0].mxu0
    %v289 = vadd.f32 %v201, %v288
    %v290 = vpop.f32.mrb[0].mxu0
    %291 = vdwg.mxu0
    %292 = vst [vmem:[#allocation7] sm:$0xff] %v286
    %293 = vst [vmem:[#allocation7 + $0x8] sm:$0xff] %v289
    %294 = vmax.xlane.f32.xlu0 %v286
    %v295 = vpop.xlane.xlu0 %294
    %296 = vmax.xlane.f32.xlu0 %v289
    %v297 = vpop.xlane.xlu0 %296
    %v298 = vsub.f32 %v286, %v295
    %v299 = vsub.f32 %v289, %v297
    %v300 = vmul.f32 %v298, 1.442695
    %v301 = vpow.pop %v300
    %v302 = vmul.f32 %v299, 1.442695
    %v303 = vpow.pop %v302
    %304 = vadd.xlane.f32.xlu0 %v301
    %v305 = vpop.xlane.xlu0 %304
    %306 = vadd.xlane.f32.xlu0 %v303
    %v307 = vpop.xlane.xlu0 %306
    %v308 = vlog2.pop %v305
    %v309 = vmul.f32 %v308, 0.6931472
    %v310 = vlog2.pop %v307
    %v311 = vmul.f32 %v310, 0.6931472
    %v312 = vadd.f32 %v309, %v295
    %v313 = vadd.f32 %v311, %v297
    %v314 = vld [vmem:[%s1] sm:$0xff]
    %v315 = vld [vmem:[%s1 + $0x8] sm:$0xff]
    %316 = vset.pattern.permute.xlu0 0
    %317 = vperm.xlu0 %316, %v314
    %v318 = vpop.permute.xlu0 %317
    %319 = vset.pattern.permute.xlu0 0
    %320 = vperm.xlu0 %319, %v315
    %v321 = vpop.permute.xlu0 %320
    %vm322 = vcmp.eq.s32.totalorder %v318, %v56
    %vm323 = vcmp.eq.s32.totalorder %v321, %v56
    %v324 = vsel %vm322, %v286, 0.0
    %v325 = vsel %vm323, %v289, 0.0
    %326 = vadd.xlane.f32.xlu0 %v324
    %v327 = vpop.xlane.xlu0 %326
    %328 = vadd.xlane.f32.xlu0 %v325
    %v329 = vpop.xlane.xlu0 %328
    %v330 = vsub.f32 %v312, %v327
    %v331 = vsub.f32 %v313, %v329
    %vm332 = vcmask 7168
    %333 = vst.msk [vmem:[%s7] sm:$0xff] %vm332, %v330
    %334 = vst.msk [vmem:[%s7 + $0x8] sm:$0xff] %vm332, %v331
    // Predicated region
    $region34: #{tpu_custom_call.1} parent=1 // pred_check
      _
    $region35: #{tpu_custom_call.1} parent=1 // pred_check_branch
      %336 = sbr.rel (0) target = $region37
    $region36: #{tpu_custom_call.1} parent=1 // pred_region
      %s338 = ssub.s32 256, 256
      %339 = vsyncadd [#allocation4], %s338
      %s340 = sshll.u32 [#allocation7], 4
      %s341 = int_to_ptr.vmem [resolvable:$true] %s340
      %346 = dma.vmem_to_hbm [thread:$0]  %s341, 256, %s6, [#allocation4], 128, 128, 8
    $region37: #{tpu_custom_call.1} parent=1 // pred_fallthru
      _
    // Predicated region
    $region38: #{tpu_custom_call.1} parent=1 // pred_check
      _
    $region39: #{tpu_custom_call.1} parent=1 // pred_check_branch
      %348 = sbr.rel (0) target = $region41
    $region40: #{tpu_custom_call.1} parent=1 // pred_region
      _
    $region41: #{tpu_custom_call.1} parent=1 // pred_fallthru
      _
    // Predicated region
    $region42: #{tpu_custom_call.1} parent=1 // pred_check
      _
    $region43: #{tpu_custom_call.1} parent=1 // pred_check_branch
      %350 = sbr.rel (0) target = $region45
    $region44: #{tpu_custom_call.1} parent=1 // pred_region
      %351 = dma.done [#allocation4], 256
    $region45: #{tpu_custom_call.1} parent=1 // pred_fallthru
      _
    // Predicated region
    $region46: #{tpu_custom_call.1} parent=1 // pred_check
      _
    $region47: #{tpu_custom_call.1} parent=1 // pred_check_branch
      %353 = sbr.rel (0) target = $region49
    $region48: #{tpu_custom_call.1} parent=1 // pred_region
      _
    $region49: #{tpu_custom_call.1} parent=1 // pred_fallthru
      _
    %354 = vsyncpa [#allocation3], 1
    %355 = vsyncpa [#allocation6], 1
    %356 = vsyncpa [#allocation4], 1

// kernel: tpu_custom_call.1
$region0: #{tpu_custom_call.1}
  #allocation0 [shape = 'u32[]', space=smem, size = 0x4, offset = 0x4, fixed_abs, tag = 'smem constant byte address 0x4 - core index']
  #allocation1 [shape = 'u32[144,128]{1,0:T(1,128)}', space=vmem, size = 0x12000, scoped, tag = 'internal scratch']
  %s0 = inlined_call_operand.vmem [shape: s32[16,1], index: 0, kind: input, shape index: {}]
  %s1 = inlined_call_operand.vmem [shape: s32[16,1], index: 1, kind: input, shape index: {}]
  %s2 = inlined_call_operand.hbm [shape: bf16[128,128], index: 2, kind: input, shape index: {}]
  %s3 = inlined_call_operand.vmem [shape: f32[16,128], index: 3, kind: input, shape index: {}]
  %s4 = inlined_call_operand.hbm [shape: bf16[128,128], index: 4, kind: input, shape index: {}]
  %s5 = inlined_call_operand.vmem [shape: f32[1,128], index: 5, kind: input, shape index: {}]
  %s6 = inlined_call_operand.hbm [shape: f32[16,128], index: 6, kind: output, shape index: {0}]
  %s7 = inlined_call_operand.vmem [shape: f32[16,1], index: 7, kind: output, shape index: {1}]
  %8 = xla_tuple %s6, %s7
  %s9 = sld [smem:[#allocation0]]
  $region50: #{tpu_custom_call.1} parent=0
    _
  %s11 = ssub.s32 1, %s9
  %s12 = scalar_select 0, %s11, %s9
  $region1: #{tpu_custom_call.1} parent=0
    #allocation2 [shape = 'u8[32768]{0}', space=vmem, size = 0x8000, scoped, tag = 'input window, operand 2, single buffered']
    #allocation3 [shape = 's32[1]{0}', space=sflag, size = 0x4, scoped, tag = 'scoped memory for tpu_custom_call.1']
    #allocation4 [shape = 's32[1]{0}', space=sflag, size = 0x4, scoped, tag = 'scoped memory for tpu_custom_call.1']
    #allocation5 [shape = 'u8[32768]{0}', space=vmem, size = 0x8000, scoped, tag = 'input window, operand 4, single buffered']
    #allocation6 [shape = 's32[1]{0}', space=sflag, size = 0x4, scoped, tag = 'scoped memory for tpu_custom_call.1']
    #allocation7 [shape = 'u8[8192]{0}', space=vmem, size = 0x2000, scoped, tag = 'output window, operand 0, single buffered']
    %13 = vsyncpa [#allocation3], 0
    %14 = vsyncpa [#allocation6], 0
    %15 = vsyncpa [#allocation4], 0
    // Predicated region
    $region2: #{tpu_custom_call.1} parent=1 // pred_check
      _
    $region3: #{tpu_custom_call.1} parent=1 // pred_check_branch
      %17 = sbr.rel (0) target = $region5
    $region4: #{tpu_custom_call.1} parent=1 // pred_region
      _
    $region5: #{tpu_custom_call.1} parent=1 // pred_fallthru
      _
    // Predicated region
    $region6: #{tpu_custom_call.1} parent=1 // pred_check
      _
    $region7: #{tpu_custom_call.1} parent=1 // pred_check_branch
      %19 = sbr.rel (0) target = $region9
    $region8: #{tpu_custom_call.1} parent=1 // pred_region
      _
    $region9: #{tpu_custom_call.1} parent=1 // pred_fallthru
      _
    // Predicated region
    $region10: #{tpu_custom_call.1} parent=1 // pred_check
      _
    $region11: #{tpu_custom_call.1} parent=1 // pred_check_branch
      %21 = sbr.rel (0) target = $region13
    $region12: #{tpu_custom_call.1} parent=1 // pred_region
      %s23 = ssub.s32 1024, 1024
      %24 = vsyncadd [#allocation3], %s23
      %s25 = sshll.u32 [#allocation2], 4
      %s26 = int_to_ptr.vmem [resolvable:$true] %s25
      %31 = dma.hbm_to_vmem [thread:$0]  %s2, 1024, %s26, [#allocation3], 64, 64, 4
    $region13: #{tpu_custom_call.1} parent=1 // pred_fallthru
      _
    // Predicated region
    $region14: #{tpu_custom_call.1} parent=1 // pred_check
      _
    $region15: #{tpu_custom_call.1} parent=1 // pred_check_branch
      %33 = sbr.rel (0) target = $region17
    $region16: #{tpu_custom_call.1} parent=1 // pred_region
      _
    $region17: #{tpu_custom_call.1} parent=1 // pred_fallthru
      _
    // Predicated region
    $region18: #{tpu_custom_call.1} parent=1 // pred_check
      _
    $region19: #{tpu_custom_call.1} parent=1 // pred_check_branch
      %35 = sbr.rel (0) target = $region21
    $region20: #{tpu_custom_call.1} parent=1 // pred_region
      %s37 = ssub.s32 1024, 1024
      %38 = vsyncadd [#allocation6], %s37
      %s39 = sshll.u32 [#allocation5], 4
      %s40 = int_to_ptr.vmem [resolvable:$true] %s39
      %45 = dma.hbm_to_vmem [thread:$0]  %s4, 1024, %s40, [#allocation6], 64, 64, 4
    $region21: #{tpu_custom_call.1} parent=1 // pred_fallthru
      _
    // Predicated region
    $region22: #{tpu_custom_call.1} parent=1 // pred_check
      _
    $region23: #{tpu_custom_call.1} parent=1 // pred_check_branch
      %47 = sbr.rel (0) target = $region25
    $region24: #{tpu_custom_call.1} parent=1 // pred_region
      _
    $region25: #{tpu_custom_call.1} parent=1 // pred_fallthru
      _
    // Predicated region
    $region26: #{tpu_custom_call.1} parent=1 // pred_check
      _
    $region27: #{tpu_custom_call.1} parent=1 // pred_check_branch
      %49 = sbr.rel (0) target = $region29
    $region28: #{tpu_custom_call.1} parent=1 // pred_region
      %50 = dma.done [#allocation3], 1024
    $region29: #{tpu_custom_call.1} parent=1 // pred_fallthru
      _
    // Predicated region
    $region30: #{tpu_custom_call.1} parent=1 // pred_check
      _
    $region31: #{tpu_custom_call.1} parent=1 // pred_check_branch
      %52 = sbr.rel (0) target = $region33
    $region32: #{tpu_custom_call.1} parent=1 // pred_region
      %53 = dma.done [#allocation6], 1024
    $region33: #{tpu_custom_call.1} parent=1 // pred_fallthru
      _
    %v55 = vlaneseq
    %v56 = vand.u32 %v55, 127
    %v57 = vld [vmem:[%s0] sm:$0xff]
    %v58 = vld [vmem:[%s0 + $0x8] sm:$0xff]
    %59 = vset.pattern.permute.xlu0 0
    %60 = vperm.xlu0 %59, %v57
    %v61 = vpop.permute.xlu0 %60
    %62 = vset.pattern.permute.xlu0 0
    %63 = vperm.xlu0 %62, %v58
    %v64 = vpop.permute.xlu0 %63
    %vm65 = vcmp.eq.s32.totalorder %v61, %v56
    %vm66 = vcmp.eq.s32.totalorder %v64, %v56
    %v67 = vsel %vm65, 1, 0
    %v68 = vsel %vm66, 1, 0
    %v69 = vcvt.s32.f32 %v67
    %v70 = vcvt.s32.f32 %v68
    %v71 = vpack.c.bf16 %v70, %v69
    %v72 = vld [vmem:[#allocation2] sm:$0xf]
    %v73 = vld [vmem:[#allocation2 + $0x4] sm:$0xf]
    %v74 = vld [vmem:[#allocation2 + $0x8] sm:$0xf]
    %v75 = vld [vmem:[#allocation2 + $0xc] sm:$0xf]
    %v76 = vld [vmem:[#allocation2 + $0x10] sm:$0xf]
    %v77 = vld [vmem:[#allocation2 + $0x14] sm:$0xf]
    %v78 = vld [vmem:[#allocation2 + $0x18] sm:$0xf]
    %v79 = vld [vmem:[#allocation2 + $0x1c] sm:$0xf]
    %v80 = vld [vmem:[#allocation2 + $0x20] sm:$0xf]
    %v81 = vld [vmem:[#allocation2 + $0x24] sm:$0xf]
    %v82 = vld [vmem:[#allocation2 + $0x28] sm:$0xf]
    %v83 = vld [vmem:[#allocation2 + $0x2c] sm:$0xf]
    %v84 = vld [vmem:[#allocation2 + $0x30] sm:$0xf]
    %v85 = vld [vmem:[#allocation2 + $0x34] sm:$0xf]
    %v86 = vld [vmem:[#allocation2 + $0x38] sm:$0xf]
    %v87 = vld [vmem:[#allocation2 + $0x3c] sm:$0xf]
    %v88 = vld [vmem:[%s3] sm:$0xff]
    %v89 = vld [vmem:[%s3 + $0x8] sm:$0xff]
    %v106 = vunpack.c.l.b16 %v72
    %v107 = vunpack.c.l.b16 %v73
    %v108 = vunpack.c.l.b16 %v74
    %v109 = vunpack.c.l.b16 %v75
    %v110 = vunpack.c.l.b16 %v76
    %v111 = vunpack.c.l.b16 %v77
    %v112 = vunpack.c.l.b16 %v78
    %v113 = vunpack.c.l.b16 %v79
    %v114 = vunpack.c.l.b16 %v80
    %v115 = vunpack.c.l.b16 %v81
    %v116 = vunpack.c.l.b16 %v82
    %v117 = vunpack.c.l.b16 %v83
    %v118 = vunpack.c.l.b16 %v84
    %v119 = vunpack.c.l.b16 %v85
    %v120 = vunpack.c.l.b16 %v86
    %v121 = vunpack.c.l.b16 %v87
    %v122 = vpack.c.b16 %v107, %v106
    %v123 = vpack.c.b16 %v109, %v108
    %v124 = vpack.c.b16 %v111, %v110
    %v125 = vpack.c.b16 %v113, %v112
    %v126 = vpack.c.b16 %v115, %v114
    %v127 = vpack.c.b16 %v117, %v116
    %v128 = vpack.c.b16 %v119, %v118
    %v129 = vpack.c.b16 %v121, %v120
    %138 = vmatprep.subr.bf16.mxu0 0
    %139 = vmatpush1.bf16.msra.mxu0 %v122
    %140 = vmatprep.subr.bf16.mxu0 0
    %141 = vmatpush1.bf16.msra.mxu0 %v123
    %142 = vmatprep.subr.bf16.mxu0 0
    %143 = vmatpush1.bf16.msra.mxu0 %v124
    %144 = vmatprep.subr.bf16.mxu0 0
    %145 = vmatpush1.bf16.msra.mxu0 %v125
    %146 = vmatprep.subr.bf16.mxu0 0
    %147 = vmatpush1.bf16.msra.mxu0 %v126
    %148 = vmatprep.subr.bf16.mxu0 0
    %149 = vmatpush1.bf16.msra.mxu0 %v127
    %150 = vmatprep.subr.bf16.mxu0 0
    %151 = vmatpush1.bf16.msra.mxu0 %v128
    %152 = vmatprep.subr.bf16.mxu0 0
    %153 = vmatpush1.bf16.msra.mxu0 %v129
    %154 = vmatprep.subr.bf16.mxu0 0
    %155 = vmatpush1.bf16.msra.mxu0 0
    %156 = vmatprep.subr.bf16.mxu0 0
    %157 = vmatpush1.bf16.msra.mxu0 0
    %158 = vmatprep.subr.bf16.mxu0 0
    %159 = vmatpush1.bf16.msra.mxu0 0
    %160 = vmatprep.subr.bf16.mxu0 0
    %161 = vmatpush1.bf16.msra.mxu0 0
    %162 = vmatprep.subr.bf16.mxu0 0
    %163 = vmatpush1.bf16.msra.mxu0 0
    %164 = vmatprep.subr.bf16.mxu0 0
    %165 = vmatpush1.bf16.msra.mxu0 0
    %166 = vmatprep.subr.bf16.mxu0 0
    %167 = vmatpush1.bf16.msra.mxu0 0
    %168 = vmatprep.subr.bf16.mxu0 0
    %169 = vmatpush1.bf16.msra.mxu0 0
    %170 = vmatprep.mubr.bf16.mxu0 0
    %171 = vmatmul.mubr.bf16.gmra.mrb[0].mxu0 %v71
    %v172 = vpop.f32.mrb[0].mxu0
    %v173 = vadd.f32 %v88, %v172
    %v174 = vpop.f32.mrb[0].mxu0
    %v175 = vpop.f32.mrb[0].mxu0
    %v176 = vadd.f32 %v89, %v175
    %v177 = vpop.f32.mrb[0].mxu0
    %178 = vdwg.mxu0
    %v179 = vpack.c.bf16 %v176, %v173
    %v180 = vld [vmem:[#allocation5] sm:$0xf]
    %v181 = vld [vmem:[#allocation5 + $0x4] sm:$0xf]
    %v182 = vld [vmem:[#allocation5 + $0x8] sm:$0xf]
    %v183 = vld [vmem:[#allocation5 + $0xc] sm:$0xf]
    %v184 = vld [vmem:[#allocation5 + $0x10] sm:$0xf]
    %v185 = vld [vmem:[#allocation5 + $0x14] sm:$0xf]
    %v186 = vld [vmem:[#allocation5 + $0x18] sm:$0xf]
    %v187 = vld [vmem:[#allocation5 + $0x1c] sm:$0xf]
    %v188 = vld [vmem:[#allocation5 + $0x20] sm:$0xf]
    %v189 = vld [vmem:[#allocation5 + $0x24] sm:$0xf]
    %v190 = vld [vmem:[#allocation5 + $0x28] sm:$0xf]
    %v191 = vld [vmem:[#allocation5 + $0x2c] sm:$0xf]
    %v192 = vld [vmem:[#allocation5 + $0x30] sm:$0xf]
    %v193 = vld [vmem:[#allocation5 + $0x34] sm:$0xf]
    %v194 = vld [vmem:[#allocation5 + $0x38] sm:$0xf]
    %v195 = vld [vmem:[#allocation5 + $0x3c] sm:$0xf]
    %v196 = vld [vmem:[%s5] sm:$0x1]
    %v198 = vlaneseq
    %v199 = vshrl.u32 %v198, 7
    %v200 = vsub.s32 0, %v199
    %v201 = vrot.slane %v196, %v200
    %v219 = vunpack.c.l.b16 %v180
    %v220 = vunpack.c.l.b16 %v181
    %v221 = vunpack.c.l.b16 %v182
    %v222 = vunpack.c.l.b16 %v183
    %v223 = vunpack.c.l.b16 %v184
    %v224 = vunpack.c.l.b16 %v185
    %v225 = vunpack.c.l.b16 %v186
    %v226 = vunpack.c.l.b16 %v187
    %v227 = vunpack.c.l.b16 %v188
    %v228 = vunpack.c.l.b16 %v189
    %v229 = vunpack.c.l.b16 %v190
    %v230 = vunpack.c.l.b16 %v191
    %v231 = vunpack.c.l.b16 %v192
    %v232 = vunpack.c.l.b16 %v193
    %v233 = vunpack.c.l.b16 %v194
    %v234 = vunpack.c.l.b16 %v195
    %v235 = vpack.c.b16 %v220, %v219
    %v236 = vpack.c.b16 %v222, %v221
    %v237 = vpack.c.b16 %v224, %v223
    %v238 = vpack.c.b16 %v226, %v225
    %v239 = vpack.c.b16 %v228, %v227
    %v240 = vpack.c.b16 %v230, %v229
    %v241 = vpack.c.b16 %v232, %v231
    %v242 = vpack.c.b16 %v234, %v233
    %251 = vmatprep.subr.bf16.mxu0 0
    %252 = vmatpush1.bf16.msra.mxu0 %v235
    %253 = vmatprep.subr.bf16.mxu0 0
    %254 = vmatpush1.bf16.msra.mxu0 %v236
    %255 = vmatprep.subr.bf16.mxu0 0
    %256 = vmatpush1.bf16.msra.mxu0 %v237
    %257 = vmatprep.subr.bf16.mxu0 0
    %258 = vmatpush1.bf16.msra.mxu0 %v238
    %259 = vmatprep.subr.bf16.mxu0 0
    %260 = vmatpush1.bf16.msra.mxu0 %v239
    %261 = vmatprep.subr.bf16.mxu0 0
    %262 = vmatpush1.bf16.msra.mxu0 %v240
    %263 = vmatprep.subr.bf16.mxu0 0
    %264 = vmatpush1.bf16.msra.mxu0 %v241
    %265 = vmatprep.subr.bf16.mxu0 0
    %266 = vmatpush1.bf16.msra.mxu0 %v242
    %267 = vmatprep.subr.bf16.mxu0 0
    %268 = vmatpush1.bf16.msra.mxu0 0
    %269 = vmatprep.subr.bf16.mxu0 0
    %270 = vmatpush1.bf16.msra.mxu0 0
    %271 = vmatprep.subr.bf16.mxu0 0
    %272 = vmatpush1.bf16.msra.mxu0 0
    %273 = vmatprep.subr.bf16.mxu0 0
    %274 = vmatpush1.bf16.msra.mxu0 0
    %275 = vmatprep.subr.bf16.mxu0 0
    %276 = vmatpush1.bf16.msra.mxu0 0
    %277 = vmatprep.subr.bf16.mxu0 0
    %278 = vmatpush1.bf16.msra.mxu0 0
    %279 = vmatprep.subr.bf16.mxu0 0
    %280 = vmatpush1.bf16.msra.mxu0 0
    %281 = vmatprep.subr.bf16.mxu0 0
    %282 = vmatpush1.bf16.msra.mxu0 0
    %283 = vmatprep.mubr.bf16.mxu0 0
    %284 = vmatmul.mubr.bf16.gmra.mrb[0].mxu0 %v179
    %v285 = vpop.f32.mrb[0].mxu0
    %v286 = vadd.f32 %v201, %v285
    %v287 = vpop.f32.mrb[0].mxu0
    %v288 = vpop.f32.mrb[0].mxu0
    %v289 = vadd.f32 %v201, %v288
    %v290 = vpop.f32.mrb[0].mxu0
    %291 = vdwg.mxu0
    %292 = vst [vmem:[#allocation7] sm:$0xff] %v286
    %293 = vst [vmem:[#allocation7 + $0x8] sm:$0xff] %v289
    %294 = vmax.xlane.f32.xlu0 %v286
    %v295 = vpop.xlane.xlu0 %294
    %296 = vmax.xlane.f32.xlu0 %v289
    %v297 = vpop.xlane.xlu0 %296
    %v298 = vsub.f32 %v286, %v295
    %v299 = vsub.f32 %v289, %v297
    %v300 = vmul.f32 %v298, 1.442695
    %v301 = vpow.pop %v300
    %v302 = vmul.f32 %v299, 1.442695
    %v303 = vpow.pop %v302
    %304 = vadd.xlane.f32.xlu0 %v301
    %v305 = vpop.xlane.xlu0 %304
    %306 = vadd.xlane.f32.xlu0 %v303
    %v307 = vpop.xlane.xlu0 %306
    %v308 = vlog2.pop %v305
    %v309 = vmul.f32 %v308, 0.6931472
    %v310 = vlog2.pop %v307
    %v311 = vmul.f32 %v310, 0.6931472
    %v312 = vadd.f32 %v309, %v295
    %v313 = vadd.f32 %v311, %v297
    %v314 = vld [vmem:[%s1] sm:$0xff]
    %v315 = vld [vmem:[%s1 + $0x8] sm:$0xff]
    %316 = vset.pattern.permute.xlu0 0
    %317 = vperm.xlu0 %316, %v314
    %v318 = vpop.permute.xlu0 %317
    %319 = vset.pattern.permute.xlu0 0
    %320 = vperm.xlu0 %319, %v315
    %v321 = vpop.permute.xlu0 %320
    %vm322 = vcmp.eq.s32.totalorder %v318, %v56
    %vm323 = vcmp.eq.s32.totalorder %v321, %v56
    %v324 = vsel %vm322, %v286, 0.0
    %v325 = vsel %vm323, %v289, 0.0
    %326 = vadd.xlane.f32.xlu0 %v324
    %v327 = vpop.xlane.xlu0 %326
    %328 = vadd.xlane.f32.xlu0 %v325
    %v329 = vpop.xlane.xlu0 %328
    %v330 = vsub.f32 %v312, %v327
    %v331 = vsub.f32 %v313, %v329
    %vm332 = vcmask 7168
    %333 = vst.msk [vmem:[%s7] sm:$0xff] %vm332, %v330
    %334 = vst.msk [vmem:[%s7 + $0x8] sm:$0xff] %vm332, %v331
    // Predicated region
    $region34: #{tpu_custom_call.1} parent=1 // pred_check
      _
    $region35: #{tpu_custom_call.1} parent=1 // pred_check_branch
      %336 = sbr.rel (0) target = $region37
    $region36: #{tpu_custom_call.1} parent=1 // pred_region
      %s338 = ssub.s32 256, 256
      %339 = vsyncadd [#allocation4], %s338
      %s340 = sshll.u32 [#allocation7], 4
      %s341 = int_to_ptr.vmem [resolvable:$true] %s340
      %346 = dma.vmem_to_hbm [thread:$0]  %s341, 256, %s6, [#allocation4], 128, 128, 8
    $region37: #{tpu_custom_call.1} parent=1 // pred_fallthru
      _
    // Predicated region
    $region38: #{tpu_custom_call.1} parent=1 // pred_check
      _
    $region39: #{tpu_custom_call.1} parent=1 // pred_check_branch
      %348 = sbr.rel (0) target = $region41
    $region40: #{tpu_custom_call.1} parent=1 // pred_region
      _
    $region41: #{tpu_custom_call.1} parent=1 // pred_fallthru
      _
    // Predicated region
    $region42: #{tpu_custom_call.1} parent=1 // pred_check
      _
    $region43: #{tpu_custom_call.1} parent=1 // pred_check_branch
      %350 = sbr.rel (0) target = $region45
    $region44: #{tpu_custom_call.1} parent=1 // pred_region
      %351 = dma.done [#allocation4], 256
    $region45: #{tpu_custom_call.1} parent=1 // pred_fallthru
      _
    // Predicated region
    $region46: #{tpu_custom_call.1} parent=1 // pred_check
      _
    $region47: #{tpu_custom_call.1} parent=1 // pred_check_branch
      %353 = sbr.rel (0) target = $region49
    $region48: #{tpu_custom_call.1} parent=1 // pred_region
      _
    $region49: #{tpu_custom_call.1} parent=1 // pred_fallthru
      _
    %354 = vsyncpa [#allocation3], 1
    %355 = vsyncpa [#allocation6], 1
    %356 = vsyncpa [#allocation4], 1

</llo_original>
